<compile_context>
chip_gen: v7x
topology: tpu7x:2x2x1
jax: 0.10.0
libtpu: 0.0.40
codegen_flags: <defaults>
</compile_context>

<pallas_src>
import jax
import jax.numpy as jnp
from jax.experimental import pallas as pl
from jax.experimental.pallas import tpu as pltpu


# ---------------------------------------------------------------------------
# Tile / VMEM-budget selection (generation- and shape-adaptive).
# ---------------------------------------------------------------------------
def _vmem_capacity_bytes():
    try:
        return int(pltpu.get_tpu_info().vmem_capacity_bytes)
    except Exception:
        return 64 * 1024 * 1024          # conservative fallback: v7x per-TC VMEM


def _divisor_tile(n, target, step):
    """Largest multiple-of-`step` divisor of n that is <= target, else n itself."""
    if n <= target:
        return n
    t = (target // step) * step
    while t >= step:
        if n % t == 0:
            return t
        t -= step
    # TODO(synk): masked ragged-L tail (iota mask + zeroed OOB enc) for awkward L;
    # for now fall back to a single full-L block.
    return n


def _select_tiles(B, L, H, enc_itemsize):
    cap = _vmem_capacity_bytes()
    budget = int(cap * 0.7)                       # headroom for compiler temps
    vmem_limit = max(32 * 1024 * 1024, int(cap * 0.9))

    sub = 16 if enc_itemsize == 2 else 8          # sublane packing of the (L_T, H) tile

    # Fixed VMEM: We (worst case double-buffered) + v + slack.
    fixed = 2 * H * H * 4 + 4 * H * 4
    avail = max(budget - fixed, 2 * 1024 * 1024)

    def per_row_bytes(bl):
        # double-buffered enc input block + f32 e_proj/energy temps + acc/out/hproj rows
        return bl * H * (2 * enc_itemsize + 8) + 24 * H

    block_l = _divisor_tile(L, 128, sub)
    while per_row_bytes(block_l) * 8 > avail and block_l > sub:
        nb = _divisor_tile(L, block_l // 2, sub)
        if nb == block_l:
            break
        block_l = nb

    block_b = int(avail // per_row_bytes(block_l))
    block_b = max(1, min(block_b, B, 512))
    if block_b >= 8:
        block_b = (block_b // 8) * 8
    # >= 2 batch grid steps for DMA/compute overlap once the batch is large enough.
    if B >= 16 and block_b >= B:
        block_b = max(8, (((B + 1) // 2 + 7) // 8) * 8)
    # Prefer an even number of batch steps so the "parallel" axis shards evenly
    # across v7x's two TensorCores.
    n_b = -(-B // block_b)
    if n_b > 2 and n_b % 2 == 1 and block_b > 8:
        cand = (((-(-B // (n_b + 1))) + 7) // 8) * 8
        if 8 <= cand < block_b and (-(-B // cand)) % 2 == 0:
            block_b = cand
    return block_b, block_l, vmem_limit


# ---------------------------------------------------------------------------
# Kernel: grid = (batch tiles [parallel], L tiles [arbitrary, online softmax]).
# ---------------------------------------------------------------------------
def attention_kernel(hproj_ref, enc_ref, we_ref, v_ref, out_ref, m_sc, l_sc, acc_sc):
    # hproj_ref: (B_T, H)      hidden @ Wh + bias, f32 (resident across L steps)
    # enc_ref:   (B_T, L_T, H) encoder tile (f32 or bf16, as delivered from HBM)
    # we_ref:    (H, H)        encoder half of the attn weight
    # v_ref:     (1, H)        scoring vector, f32
    # out_ref:   (B_T, H)      context (lane-dense 2-D slab, written on last L step)
    li = pl.program_id(1)

    @pl.when(li == 0)
    def _init():
        m_sc[...] = jnp.full_like(m_sc[...], -jnp.inf)
        l_sc[...] = jnp.zeros_like(l_sc[...])
        acc_sc[...] = jnp.zeros_like(acc_sc[...])

    bt, lt, H = enc_ref.shape
    enc = enc_ref[...]

    # Fused encoder projection: ONE (B_T*L_T, H) x (H, H) MXU matmul, f32 accumulation.
    # L tiles are kept sublane-aligned (8 f32 / 16 bf16) so this collapse is layout-free.
    e_proj = jnp.dot(
        enc.reshape(bt * lt, H), we_ref[...],
        preferred_element_type=jnp.float32,
    ).reshape(bt, lt, H)                                           # (B_T, L_T, H) f32

    # energy = tanh(h_proj + e_proj); bias already folded into h_proj (f32 EUP/VPU).
    energy = jnp.tanh(e_proj + hproj_ref[...][:, None, :])         # (B_T, L_T, H) f32

    # Scoring Linear(H->1): VPU multiply + lane reduce (v kept in f32).
    scores = jnp.sum(energy * v_ref[...], axis=-1)                 # (B_T, L_T) f32

    # Online softmax over the L axis (flash-style running max / denom).
    m_prev = m_sc[...]
    m_new = jnp.maximum(m_prev, jnp.max(scores, axis=-1, keepdims=True))
    alpha = jnp.exp(m_prev - m_new)
    p = jnp.exp(scores - m_new)                                    # (B_T, L_T) f32
    l_sc[...] = alpha * l_sc[...] + jnp.sum(p, axis=-1, keepdims=True)

    # Context accumulation in f32 on the VPU: an (1,L_T)x(L_T,H) MXU matmul per batch
    # row has <1% row utilization, so multiply + sublane reduce is the better slot.
    acc_sc[...] = alpha * acc_sc[...] + jnp.sum(
        enc.astype(jnp.float32) * p[..., None], axis=1)            # (B_T, H) f32
    m_sc[...] = m_new

    @pl.when(li == pl.num_programs(1) - 1)
    def _finalize():
        # TODO(synk): pl.reciprocal(..., approx=True) for a free EUP slot in prod;
        # exact here so the f32 path matches the reference to 1e-5.
        out_ref[...] = (acc_sc[...] *
                        pl.reciprocal(l_sc[...], approx=False)).astype(out_ref.dtype)


# ---------------------------------------------------------------------------
# Wrapper.
# ---------------------------------------------------------------------------
def attention_forward(hidden, encoder_outputs, attn_w, attn_b, v_w,
                      *, block_b=None, block_l=None):
    """
    hidden:          [B, H]      float32
    encoder_outputs: [B, L, H]   float32 or bfloat16 (dtype decides MXU operand dtype)
    attn_w:          [H, 2H]     (PyTorch nn.Linear(2H, H).weight)
    attn_b:          [H]         (PyTorch nn.Linear(2H, H).bias)
    v_w:             [1, H]      (PyTorch nn.Linear(H, 1, bias=False).weight)
    returns context: [B, H]
    """
    B, H = hidden.shape
    _, L, _ = encoder_outputs.shape
    out_dtype = hidden.dtype

    # Split Linear(2H -> H) so the concat never materializes:
    #   concat(h, e) @ W.T == h @ Wh + e @ We
    w_t = attn_w.T                                                 # [2H, H]
    wh = w_t[:H, :].astype(jnp.float32)
    we = w_t[H:, :]

    # Hoisted hidden projection (+ bias): one small [B,H]x[H,H] matmul outside.
    h_proj = hidden.astype(jnp.float32) @ wh + attn_b.astype(jnp.float32)[None, :]

    # MXU operands follow the encoder-outputs dtype. We only cast the tiny (H,H)
    # weight — never the big [B,L,H] tensor (that would add a full HBM pass).
    enc = encoder_outputs
    we = we.astype(enc.dtype)
    v2 = v_w.reshape(1, H).astype(jnp.float32)     # v stays f32 (tiny; avoids rounding)

    esz = jnp.dtype(enc.dtype).itemsize
    auto_bb, auto_bl, vmem_limit = _select_tiles(B, L, H, esz)
    bb = min(block_b if block_b is not None else auto_bb, B)
    bl = block_l if block_l is not None else auto_bl
    if L % bl != 0:
        bl = L                                       # keep L tiles exact (no ragged tail)
    n_b = pl.cdiv(B, bb)                              # last batch block may read OOB rows
    n_l = L // bl

    cost = pl.CostEstimate(
        flops=2 * B * L * H * H + 6 * B * L * H,
        transcendentals=B * L * (H + 2),
        bytes_accessed=(enc.size * esz + h_proj.size * 4
                        + we.size * we.dtype.itemsize + v2.size * 4
                        + B * H * jnp.dtype(out_dtype).itemsize),
    )

    out = pl.pallas_call(
        attention_kernel,
        out_shape=jax.ShapeDtypeStruct((B, H), out_dtype),
        grid_spec=pltpu.PrefetchScalarGridSpec(
            num_scalar_prefetch=0,
            grid=(n_b, n_l),
            in_specs=[
                pl.BlockSpec((bb, H), lambda i, l: (i, 0)),          # h_proj (resident over L)
                pl.BlockSpec((bb, bl, H), lambda i, l: (i, l, 0)),   # encoder tile
                # TODO(synk): pipeline_mode=pl.Buffered(1) on the constant We / v blocks
                # (drops their dead double-buffer inside v7x's 64 MiB) once verified on
                # the deployed jax build.
                pl.BlockSpec((H, H), lambda i, l: (0, 0)),           # We
                pl.BlockSpec((1, H), lambda i, l: (0, 0)),           # v (f32)
            ],
            out_specs=pl.BlockSpec((bb, H), lambda i, l: (i, 0)),    # lane-dense slab
            scratch_shapes=[
                pltpu.VMEM((bb, 1), jnp.float32),   # running max
                pltpu.VMEM((bb, 1), jnp.float32),   # running softmax denom
                pltpu.VMEM((bb, H), jnp.float32),   # running context accumulator
            ],
        ),
        compiler_params=pltpu.CompilerParams(
            dimension_semantics=("parallel", "arbitrary"),
            vmem_limit_bytes=vmem_limit,
        ),
        cost_estimate=cost,
    )(h_proj, enc, we, v2)

    return out


def attention_reference(hidden, encoder_outputs, attn_w, attn_b, v_w):
    """Pure-JAX reference mirroring the PyTorch forward."""
    L = encoder_outputs.shape[1]
    rep = jnp.repeat(hidden[:, None, :], L, axis=1)                   # [B, L, H]
    cat = jnp.concatenate([rep, encoder_outputs], axis=2)             # [B, L, 2H]
    energy = jnp.tanh(cat @ attn_w.T + attn_b)                        # [B, L, H]
    scores = (energy @ v_w.T)[..., 0]                                 # [B, L]
    weights = jax.nn.softmax(scores, axis=1)                          # [B, L]
    return jnp.sum(encoder_outputs * weights[..., None], axis=1)      # [B, H]


if __name__ == "__main__":
    B, L, H = 2, 8, 32
    key = jax.random.PRNGKey(0)
    k_h, k_e, k_w, k_b, k_v = jax.random.split(key, 5)

    hidden = jax.random.normal(k_h, (B, H), dtype=jnp.float32)
    encoder_outputs = jax.random.normal(k_e, (B, L, H), dtype=jnp.float32)

    # Deterministic params mimicking nn.Linear's U(-1/sqrt(fan_in), 1/sqrt(fan_in)).
    bound_attn = 1.0 / jnp.sqrt(2.0 * H)
    attn_w = jax.random.uniform(k_w, (H, 2 * H), jnp.float32, -bound_attn, bound_attn)
    attn_b = jax.random.uniform(k_b, (H,), jnp.float32, -bound_attn, bound_attn)
    bound_v = 1.0 / jnp.sqrt(1.0 * H)
    v_w = jax.random.uniform(k_v, (1, H), jnp.float32, -bound_v, bound_v)

    ref = attention_reference(hidden, encoder_outputs, attn_w, attn_b, v_w)

    # Full-precision path.
    ctx = attention_forward(hidden, encoder_outputs, attn_w, attn_b, v_w)
    jax.block_until_ready(ctx)
    assert ctx.shape == (B, H)
    assert jnp.allclose(ctx, ref, atol=1e-5, rtol=1e-5), "f32 kernel mismatch vs reference"

    # Non-divisible batch: no jnp.pad HBM pass; the tail block reads OOB rows that are
    # per-row independent and never written back.
    B2 = 20
    k_h2, k_e2 = jax.random.split(jax.random.PRNGKey(1), 2)
    hidden2 = jax.random.normal(k_h2, (B2, H), dtype=jnp.float32)
    enc2 = jax.random.normal(k_e2, (B2, L, H), dtype=jnp.float32)
    ref2 = attention_reference(hidden2, enc2, attn_w, attn_b, v_w)
    ctx2 = attention_forward(hidden2, enc2, attn_w, attn_b, v_w)
    jax.block_until_ready(ctx2)
    assert ctx2.shape == (B2, H)
    assert jnp.allclose(ctx2, ref2, atol=1e-5, rtol=1e-5), "tail-block kernel mismatch"

    # bf16-upstream path: encoder outputs already bf16 (no standalone wrapper cast);
    # bf16 MXU operands, f32 accumulation + f32 softmax/context math (all generations,
    # including v5e, since only the VPU/EUP parts require f32 there).
    ctx_bf16 = attention_forward(hidden, encoder_outputs.astype(jnp.bfloat16),
                                 attn_w, attn_b, v_w)
    jax.block_until_ready(ctx_bf16)
    assert ctx_bf16.shape == (B, H)
    assert jnp.allclose(ctx_bf16, ref, atol=5e-2, rtol=5e-2), "bf16 kernel mismatch"

    print("KERNEL_OK")
</pallas_src>

<mosaic_0001>
module attributes {stable_mosaic.version = 11 : i64} {
  func.func @attention_kernel(%arg0: i32, %arg1: i32, %arg2: memref<2x32xf32, #tpu.memory_space<vmem>>, %arg3: memref<2x8x32xf32, #tpu.memory_space<vmem>>, %arg4: memref<32x32xf32, #tpu.memory_space<vmem>>, %arg5: memref<1x32xf32, #tpu.memory_space<vmem>>, %arg6: memref<2x32xf32, #tpu.memory_space<vmem>>, %arg7: memref<2x1xf32, #tpu.memory_space<vmem>>, %arg8: memref<2x1xf32, #tpu.memory_space<vmem>>, %arg9: memref<2x32xf32, #tpu.memory_space<vmem>>) attributes {dimension_semantics = [#tpu.dimension_semantics<parallel>, #tpu.dimension_semantics<arbitrary>], iteration_bounds = array<i64: 1, 1>, scalar_prefetch = 0 : i64, scratch_operands = 3 : i64, tpu.core_type = #tpu.core_type<tc>, window_params = [{transform_indices = @transform_0, window_bounds = array<i64: 2, 32>}, {transform_indices = @transform_1, window_bounds = array<i64: 2, 8, 32>}, {pipeline_mode = #tpu.pipeline_mode<synchronous>, transform_indices = @transform_2, window_bounds = array<i64: 32, 32>}, {pipeline_mode = #tpu.pipeline_mode<synchronous>, transform_indices = @transform_3, window_bounds = array<i64: 1, 32>}, {transform_indices = @transform_4, window_bounds = array<i64: 2, 32>}]} {
    %c0_i32 = arith.constant 0 : i32
    %0 = arith.cmpi eq, %arg1, %c0_i32 : i32
    %1 = arith.extui %0 : i1 to i32
    %c0_i32_0 = arith.constant 0 : i32
    %2 = arith.cmpi ne, %1, %c0_i32_0 : i32
    scf.if %2 {
      %cst_27 = arith.constant 0xFF800000 : f32
      %46 = vector.broadcast %cst_27 : f32 to vector<2x1xf32>
      %c0_28 = arith.constant 0 : index
      %c0_29 = arith.constant 0 : index
      %47 = vector.load %arg7[%c0_28, %c0_29] : memref<2x1xf32, #tpu.memory_space<vmem>>, vector<2x1xf32>
      tpu.vector_store %arg7[%c0_28, %c0_29], %46 {strides = array<i32>} : memref<2x1xf32, #tpu.memory_space<vmem>>, vector<2x1xf32>,
      %cst_30 = arith.constant 0.000000e+00 : f32
      %48 = vector.broadcast %cst_30 : f32 to vector<2x1xf32>
      %c0_31 = arith.constant 0 : index
      %c0_32 = arith.constant 0 : index
      %49 = vector.load %arg8[%c0_31, %c0_32] : memref<2x1xf32, #tpu.memory_space<vmem>>, vector<2x1xf32>
      tpu.vector_store %arg8[%c0_31, %c0_32], %48 {strides = array<i32>} : memref<2x1xf32, #tpu.memory_space<vmem>>, vector<2x1xf32>,
      %cst_33 = arith.constant 0.000000e+00 : f32
      %50 = vector.broadcast %cst_33 : f32 to vector<2x32xf32>
      %c0_34 = arith.constant 0 : index
      %c0_35 = arith.constant 0 : index
      %51 = vector.load %arg9[%c0_34, %c0_35] : memref<2x32xf32, #tpu.memory_space<vmem>>, vector<2x32xf32>
      tpu.vector_store %arg9[%c0_34, %c0_35], %50 {strides = array<i32>} : memref<2x32xf32, #tpu.memory_space<vmem>>, vector<2x32xf32>,
    } else {
    }
    %c0 = arith.constant 0 : index
    %c0_1 = arith.constant 0 : index
    %c0_2 = arith.constant 0 : index
    %3 = vector.load %arg3[%c0, %c0_1, %c0_2] : memref<2x8x32xf32, #tpu.memory_space<vmem>>, vector<2x8x32xf32>
    %4 = vector.shape_cast %3 : vector<2x8x32xf32> to vector<16x32xf32>
    %c0_3 = arith.constant 0 : index
    %c0_4 = arith.constant 0 : index
    %5 = vector.load %arg4[%c0_3, %c0_4] : memref<32x32xf32, #tpu.memory_space<vmem>>, vector<32x32xf32>
    %cst = arith.constant dense<0.000000e+00> : vector<16x32xf32>
    %6 = tpu.matmul %4, %5, %cst {dimension_numbers = #tpu.dot_dimension_numbers<[1], [0], [0], [1], [0, 0, 1, 1], [], []>} : vector<16x32xf32>, vector<32x32xf32>, vector<16x32xf32> -> vector<16x32xf32>
    %7 = vector.shape_cast %6 : vector<16x32xf32> to vector<2x8x32xf32>
    %c0_5 = arith.constant 0 : index
    %c0_6 = arith.constant 0 : index
    %8 = vector.load %arg2[%c0_5, %c0_6] : memref<2x32xf32, #tpu.memory_space<vmem>>, vector<2x32xf32>
    %9 = vector.shape_cast %8 : vector<2x32xf32> to vector<2x1x32xf32>
    %10 = vector.broadcast %9 : vector<2x1x32xf32> to vector<2x8x32xf32>
    %11 = arith.addf %7, %10 : vector<2x8x32xf32>
    %12 = math.tanh %11 : vector<2x8x32xf32>
    %c0_7 = arith.constant 0 : index
    %c0_8 = arith.constant 0 : index
    %13 = vector.load %arg5[%c0_7, %c0_8] : memref<1x32xf32, #tpu.memory_space<vmem>>, vector<1x32xf32>
    %14 = vector.shape_cast %13 : vector<1x32xf32> to vector<1x1x32xf32>
    %15 = vector.broadcast %14 : vector<1x1x32xf32> to vector<2x8x32xf32>
    %16 = arith.mulf %12, %15 : vector<2x8x32xf32>
    %cst_9 = arith.constant dense<0.000000e+00> : vector<2x8xf32>
    %17 = vector.multi_reduction <add>, %16, %cst_9 [2] : vector<2x8x32xf32> to vector<2x8xf32>
    %c0_10 = arith.constant 0 : index
    %c0_11 = arith.constant 0 : index
    %18 = vector.load %arg7[%c0_10, %c0_11] : memref<2x1xf32, #tpu.memory_space<vmem>>, vector<2x1xf32>
    %cst_12 = arith.constant dense<0xFF800000> : vector<2xf32>
    %19 = vector.multi_reduction <maximumf>, %17, %cst_12 [1] : vector<2x8xf32> to vector<2xf32>
    %20 = vector.shape_cast %19 : vector<2xf32> to vector<2x1xf32>
    %21 = arith.maximumf %18, %20 : vector<2x1xf32>
    %22 = arith.subf %18, %21 : vector<2x1xf32>
    %23 = math.exp %22 : vector<2x1xf32>
    %24 = vector.broadcast %21 : vector<2x1xf32> to vector<2x8xf32>
    %25 = arith.subf %17, %24 : vector<2x8xf32>
    %26 = math.exp %25 : vector<2x8xf32>
    %c0_13 = arith.constant 0 : index
    %c0_14 = arith.constant 0 : index
    %27 = vector.load %arg8[%c0_13, %c0_14] : memref<2x1xf32, #tpu.memory_space<vmem>>, vector<2x1xf32>
    %28 = arith.mulf %23, %27 : vector<2x1xf32>
    %cst_15 = arith.constant dense<0.000000e+00> : vector<2xf32>
    %29 = vector.multi_reduction <add>, %26, %cst_15 [1] : vector<2x8xf32> to vector<2xf32>
    %30 = vector.shape_cast %29 : vector<2xf32> to vector<2x1xf32>
    %31 = arith.addf %28, %30 : vector<2x1xf32>
    %c0_16 = arith.constant 0 : index
    %c0_17 = arith.constant 0 : index
    %32 = vector.load %arg8[%c0_16, %c0_17] : memref<2x1xf32, #tpu.memory_space<vmem>>, vector<2x1xf32>
    tpu.vector_store %arg8[%c0_16, %c0_17], %31 {strides = array<i32>} : memref<2x1xf32, #tpu.memory_space<vmem>>, vector<2x1xf32>,
    %c0_18 = arith.constant 0 : index
    %c0_19 = arith.constant 0 : index
    %33 = vector.load %arg9[%c0_18, %c0_19] : memref<2x32xf32, #tpu.memory_space<vmem>>, vector<2x32xf32>
    %34 = vector.broadcast %23 : vector<2x1xf32> to vector<2x32xf32>
    %35 = arith.mulf %34, %33 : vector<2x32xf32>
    %36 = vector.shape_cast %26 : vector<2x8xf32> to vector<2x8x1xf32>
    %37 = vector.broadcast %36 : vector<2x8x1xf32> to vector<2x8x32xf32>
    %38 = arith.mulf %3, %37 : vector<2x8x32xf32>
    %cst_20 = arith.constant dense<0.000000e+00> : vector<2x32xf32>
    %39 = vector.multi_reduction <add>, %38, %cst_20 [1] : vector<2x8x32xf32> to vector<2x32xf32>
    %40 = arith.addf %35, %39 : vector<2x32xf32>
    %c0_21 = arith.constant 0 : index
    %c0_22 = arith.constant 0 : index
    %41 = vector.load %arg9[%c0_21, %c0_22] : memref<2x32xf32, #tpu.memory_space<vmem>>, vector<2x32xf32>
    tpu.vector_store %arg9[%c0_21, %c0_22], %40 {strides = array<i32>} : memref<2x32xf32, #tpu.memory_space<vmem>>, vector<2x32xf32>,
    %c0_23 = arith.constant 0 : index
    %c0_24 = arith.constant 0 : index
    %42 = vector.load %arg7[%c0_23, %c0_24] : memref<2x1xf32, #tpu.memory_space<vmem>>, vector<2x1xf32>
    tpu.vector_store %arg7[%c0_23, %c0_24], %21 {strides = array<i32>} : memref<2x1xf32, #tpu.memory_space<vmem>>, vector<2x1xf32>,
    %c0_i32_25 = arith.constant 0 : i32
    %43 = arith.cmpi eq, %arg1, %c0_i32_25 : i32
    %44 = arith.extui %43 : i1 to i32
    %c0_i32_26 = arith.constant 0 : i32
    %45 = arith.cmpi ne, %44, %c0_i32_26 : i32
    scf.if %45 {
      %c0_27 = arith.constant 0 : index
      %c0_28 = arith.constant 0 : index
      %46 = vector.load %arg9[%c0_27, %c0_28] : memref<2x32xf32, #tpu.memory_space<vmem>>, vector<2x32xf32>
      %c0_29 = arith.constant 0 : index
      %c0_30 = arith.constant 0 : index
      %47 = vector.load %arg8[%c0_29, %c0_30] : memref<2x1xf32, #tpu.memory_space<vmem>>, vector<2x1xf32>
      %48 = tpu.reciprocal %47 : vector<2x1xf32> -> vector<2x1xf32>
      %49 = vector.broadcast %48 : vector<2x1xf32> to vector<2x32xf32>
      %50 = arith.mulf %46, %49 : vector<2x32xf32>
      %c0_31 = arith.constant 0 : index
      %c0_32 = arith.constant 0 : index
      %51 = vector.load %arg6[%c0_31, %c0_32] : memref<2x32xf32, #tpu.memory_space<vmem>>, vector<2x32xf32>
      tpu.vector_store %arg6[%c0_31, %c0_32], %50 {strides = array<i32>} : memref<2x32xf32, #tpu.memory_space<vmem>>, vector<2x32xf32>,
    } else {
    }
    return
  }
  func.func @transform_0(%arg0: i32, %arg1: i32) -> (i32, i32) {
    %c0_i32 = arith.constant 0 : i32
    %c0_i32_0 = arith.constant 0 : i32
    return %arg0, %c0_i32 : i32, i32
  }
  func.func @transform_1(%arg0: i32, %arg1: i32) -> (i32, i32, i32) {
    %c0_i32 = arith.constant 0 : i32
    %c0_i32_0 = arith.constant 0 : i32
    return %arg0, %arg1, %c0_i32 : i32, i32, i32
  }
  func.func @transform_2(%arg0: i32, %arg1: i32) -> (i32, i32) {
    %c0_i32 = arith.constant 0 : i32
    %c0_i32_0 = arith.constant 0 : i32
    %c0_i32_1 = arith.constant 0 : i32
    return %c0_i32, %c0_i32_0 : i32, i32
  }
  func.func @transform_3(%arg0: i32, %arg1: i32) -> (i32, i32) {
    %c0_i32 = arith.constant 0 : i32
    %c0_i32_0 = arith.constant 0 : i32
    %c0_i32_1 = arith.constant 0 : i32
    return %c0_i32, %c0_i32_0 : i32, i32
  }
  func.func @transform_4(%arg0: i32, %arg1: i32) -> (i32, i32) {
    %c0_i32 = arith.constant 0 : i32
    %c0_i32_0 = arith.constant 0 : i32
    return %arg0, %c0_i32 : i32, i32
  }
}

</mosaic_0001>

<llo_original>
// kernel: tpu_custom_call.1
$region0: #{tpu_custom_call.1}
  #allocation0 [shape = 'u32[]', space=smem, size = 0x4, offset = 0x4, fixed_abs, tag = 'smem constant byte address 0x4 - core index']
  #allocation1 [shape = 'u32[144,128]{1,0:T(1,128)}', space=vmem, size = 0x12000, scoped, tag = 'internal scratch']
  #allocation2 [shape = 'f32[2,1]{1,0:T(2,128)}', space=vmem, size = 0x400, scoped, tag = 'scratch operand']
  #allocation3 [shape = 'f32[2,1]{1,0:T(2,128)}', space=vmem, size = 0x400, scoped, tag = 'scratch operand']
  #allocation4 [shape = 'f32[2,32]{1,0:T(2,128)}', space=vmem, size = 0x400, scoped, tag = 'scratch operand']
  %s0 = inlined_call_operand.hbm [shape: f32[2,32], index: 0, kind: input, shape index: {}]
  %s1 = inlined_call_operand.hbm [shape: f32[2,8,32], index: 1, kind: input, shape index: {}]
  %s2 = inlined_call_operand.hbm [shape: f32[32,32], index: 2, kind: input, shape index: {}]
  %s3 = inlined_call_operand.vmem [shape: f32[1,32], index: 3, kind: input, shape index: {}]
  %s4 = inlined_call_operand.hbm [shape: f32[2,32], index: 4, kind: output, shape index: {}]
  %s5 = sld [smem:[#allocation0]]
  $region46: #{tpu_custom_call.1} parent=0
    _
  %s7 = ssub.s32 1, %s5
  %s8 = scalar_select 0, %s7, %s5
  $region1: #{tpu_custom_call.1} parent=0
    #allocation5 [shape = 'u8[1024]{0}', space=vmem, size = 0x400, scoped, tag = 'input window, operand 0, single buffered']
    #allocation6 [shape = 's32[1]{0}', space=sflag, size = 0x4, scoped, tag = 'scoped memory for tpu_custom_call.1']
    #allocation7 [shape = 's32[1]{0}', space=sflag, size = 0x4, scoped, tag = 'scoped memory for tpu_custom_call.1']
    #allocation8 [shape = 'u8[8192]{0}', space=vmem, size = 0x2000, scoped, tag = 'input window, operand 1, single buffered']
    #allocation9 [shape = 's32[1]{0}', space=sflag, size = 0x4, scoped, tag = 'scoped memory for tpu_custom_call.1']
    #allocation10 [shape = 'u8[16384]{0}', space=vmem, size = 0x4000, scoped, tag = 'input window, operand 2, single buffered']
    #allocation11 [shape = 'u8[1024]{0}', space=vmem, size = 0x400, scoped, tag = 'output window, operand 0, single buffered']
    %9 = vsyncpa [#allocation6], 0
    %10 = vsyncpa [#allocation9], 0
    %11 = vsyncpa [#allocation7], 0
    // Predicated region
    $region2: #{tpu_custom_call.1} parent=1 // pred_check
      _
    $region3: #{tpu_custom_call.1} parent=1 // pred_check_branch
      %13 = sbr.rel (0) target = $region5
    $region4: #{tpu_custom_call.1} parent=1 // pred_region
      %s15 = ssub.s32 32, 32
      %16 = vsyncadd [#allocation6], %s15
      %s18 = sshll.u32 [#allocation5], 4
      %s19 = int_to_ptr.vmem [resolvable:$true] %s18
      %21 = dma.hbm_to_vmem [thread:$0]  %s0, 32, %s19, [#allocation6]
    $region5: #{tpu_custom_call.1} parent=1 // pred_fallthru
      _
    // Predicated region
    $region6: #{tpu_custom_call.1} parent=1 // pred_check
      _
    $region7: #{tpu_custom_call.1} parent=1 // pred_check_branch
      %23 = sbr.rel (0) target = $region9
    $region8: #{tpu_custom_call.1} parent=1 // pred_region
      %s25 = ssub.s32 256, 256
      %26 = vsyncadd [#allocation9], %s25
      %s27 = sshll.u32 [#allocation8], 4
      %s28 = int_to_ptr.vmem [resolvable:$true] %s27
      %33 = dma.hbm_to_vmem [thread:$0]  %s1, 256, %s28, [#allocation9], 128, 128, 8
    $region9: #{tpu_custom_call.1} parent=1 // pred_fallthru
      _
    // Predicated region
    $region10: #{tpu_custom_call.1} parent=1 // pred_check
      _
    $region11: #{tpu_custom_call.1} parent=1 // pred_check_branch
      %35 = sbr.rel (0) target = $region13
    $region12: #{tpu_custom_call.1} parent=1 // pred_region
      %s37 = ssub.s32 512, 512
      %38 = vsyncadd [#allocation9], %s37
      %s39 = sshll.u32 [#allocation10], 4
      %s40 = int_to_ptr.vmem [resolvable:$true] %s39
      %45 = dma.hbm_to_vmem [thread:$0]  %s2, 512, %s40, [#allocation9], 128, 128, 8
    $region13: #{tpu_custom_call.1} parent=1 // pred_fallthru
      _
    // Predicated region
    $region14: #{tpu_custom_call.1} parent=1 // pred_check
      _
    $region15: #{tpu_custom_call.1} parent=1 // pred_check_branch
      %47 = sbr.rel (0) target = $region17
    $region16: #{tpu_custom_call.1} parent=1 // pred_region
      _
    $region17: #{tpu_custom_call.1} parent=1 // pred_fallthru
      _
    // Predicated region
    $region18: #{tpu_custom_call.1} parent=1 // pred_check
      _
    $region19: #{tpu_custom_call.1} parent=1 // pred_check_branch
      %49 = sbr.rel (0) target = $region21
    $region20: #{tpu_custom_call.1} parent=1 // pred_region
      %50 = dma.done [#allocation6], 32
    $region21: #{tpu_custom_call.1} parent=1 // pred_fallthru
      _
    // Predicated region
    $region22: #{tpu_custom_call.1} parent=1 // pred_check
      _
    $region23: #{tpu_custom_call.1} parent=1 // pred_check_branch
      %52 = sbr.rel (0) target = $region25
    $region24: #{tpu_custom_call.1} parent=1 // pred_region
      %53 = dma.done [#allocation9], 256
    $region25: #{tpu_custom_call.1} parent=1 // pred_fallthru
      _
    // Predicated region
    $region26: #{tpu_custom_call.1} parent=1 // pred_check
      _
    $region27: #{tpu_custom_call.1} parent=1 // pred_check_branch
      %55 = sbr.rel (0) target = $region29
    $region28: #{tpu_custom_call.1} parent=1 // pred_region
      %56 = dma.done [#allocation9], 512
    $region29: #{tpu_custom_call.1} parent=1 // pred_fallthru
      _
    %p57 = scmp.eq.s32.totalorder 0, 0
    // Predicated region
    $region30: #{tpu_custom_call.1} parent=1 // pred_check
      %p58 = pneg %p57
    $region31: #{tpu_custom_call.1} parent=1 // pred_check_branch
      %60 = sbr.rel (%p58) target = $region33
    $region32: #{tpu_custom_call.1} parent=1 // pred_region
      %vm61 = vcmask 1024
      %62 = vst.msk [vmem:[#allocation2] sm:$0x3] %vm61, -inf
      %63 = vst.msk [vmem:[#allocation3] sm:$0x3] %vm61, 0.0
      %vm64 = vcmask 254976
      %65 = vst.msk [vmem:[#allocation4] sm:$0x3] %vm64, 0.0
    $region33: #{tpu_custom_call.1} parent=1 // pred_fallthru
      _
    %v66 = vld [vmem:[#allocation8] sm:$0xff]
    %v67 = vld [vmem:[#allocation8 + $0x8] sm:$0xff]
    %v68 = vld [vmem:[#allocation10] sm:$0xff]
    %v69 = vld [vmem:[#allocation10 + $0x8] sm:$0xff]
    %v70 = vld [vmem:[#allocation10 + $0x10] sm:$0xff]
    %v71 = vld [vmem:[#allocation10 + $0x18] sm:$0xff]
    %vm72 = vcmask 261120
    %v74 = vsel %vm72, %v66, 0
    %v77 = vsel %vm72, %v67, 0
    %79 = vmatprep.subr.mxu0 0.0
    %80 = vmatpush1.msra.mxu0 %v68
    %81 = vmatprep.subr.mxu0 0.0
    %82 = vmatpush1.msra.mxu0 %v69
    %83 = vmatprep.subr.mxu0 0.0
    %84 = vmatpush1.msra.mxu0 %v70
    %85 = vmatprep.subr.mxu0 0.0
    %86 = vmatpush1.msra.mxu0 %v71
    %87 = vmatprep.subr.mxu0 0.0
    %88 = vmatpush1.msra.mxu0 0.0
    %89 = vmatprep.subr.mxu0 0.0
    %90 = vmatpush1.msra.mxu0 0.0
    %91 = vmatprep.subr.mxu0 0.0
    %92 = vmatpush1.msra.mxu0 0.0
    %93 = vmatprep.subr.mxu0 0.0
    %94 = vmatpush1.msra.mxu0 0.0
    %95 = vmatprep.subr.mxu0 0.0
    %96 = vmatpush1.msra.mxu0 0.0
    %97 = vmatprep.subr.mxu0 0.0
    %98 = vmatpush1.msra.mxu0 0.0
    %99 = vmatprep.subr.mxu0 0.0
    %100 = vmatpush1.msra.mxu0 0.0
    %101 = vmatprep.subr.mxu0 0.0
    %102 = vmatpush1.msra.mxu0 0.0
    %103 = vmatprep.subr.mxu0 0.0
    %104 = vmatpush1.msra.mxu0 0.0
    %105 = vmatprep.subr.mxu0 0.0
    %106 = vmatpush1.msra.mxu0 0.0
    %107 = vmatprep.subr.mxu0 0.0
    %108 = vmatpush1.msra.mxu0 0.0
    %109 = vmatprep.subr.mxu0 0.0
    %110 = vmatpush1.msra.mxu0 0.0
    %111 = vmatprep.subr.mxu0 0.0
    %112 = vmatpush1.msra.mxu0 0.0
    %113 = vmatprep.subr.mxu0 0.0
    %114 = vmatpush1.msra.mxu0 0.0
    %115 = vmatprep.subr.mxu0 0.0
    %116 = vmatpush1.msra.mxu0 0.0
    %117 = vmatprep.subr.mxu0 0.0
    %118 = vmatpush1.msra.mxu0 0.0
    %119 = vmatprep.subr.mxu0 0.0
    %120 = vmatpush1.msra.mxu0 0.0
    %121 = vmatprep.subr.mxu0 0.0
    %122 = vmatpush1.msra.mxu0 0.0
    %123 = vmatprep.subr.mxu0 0.0
    %124 = vmatpush1.msra.mxu0 0.0
    %125 = vmatprep.subr.mxu0 0.0
    %126 = vmatpush1.msra.mxu0 0.0
    %127 = vmatprep.subr.mxu0 0.0
    %128 = vmatpush1.msra.mxu0 0.0
    %129 = vmatprep.subr.mxu0 0.0
    %130 = vmatpush1.msra.mxu0 0.0
    %131 = vmatprep.subr.mxu0 0.0
    %132 = vmatpush1.msra.mxu0 0.0
    %133 = vmatprep.subr.mxu0 0.0
    %134 = vmatpush1.msra.mxu0 0.0
    %135 = vmatprep.subr.mxu0 0.0
    %136 = vmatpush1.msra.mxu0 0.0
    %137 = vmatprep.subr.mxu0 0.0
    %138 = vmatpush1.msra.mxu0 0.0
    %139 = vmatprep.subr.mxu0 0.0
    %140 = vmatpush1.msra.mxu0 0.0
    %141 = vmatprep.subr.mxu0 0.0
    %142 = vmatpush1.msra.mxu0 0.0
    %143 = vmatprep.mubr.f32.mxu0 0.0
    %144 = vmatmul.mubr.f32.gmra.mrb[0].mxu0 %v74
    %v145 = vpop.f32.mrb[0].mxu0
    %v146 = vadd.f32 0.0, %v145
    %v147 = vpop.f32.mrb[0].mxu0
    %148 = vmatprep.mubr.f32.mxu0 0.0
    %149 = vmatmul.mubr.f32.gmra.mrb[0].mxu0 %v77
    %v150 = vpop.f32.mrb[0].mxu0
    %v151 = vadd.f32 0.0, %v150
    %v152 = vpop.f32.mrb[0].mxu0
    %153 = vdwg.mxu0
    %v154 = vld [vmem:[#allocation5] sm:$0x3]
    %v157 = vunpack.c.l.s4 1966171168
    %v158 = vunpack.c.0.s8 %v157
    %v159 = vlaneseq
    %v160 = vshrl.u32 %v159, 7
    %v161 = vsub.s32 %v158, %v160
    %v162 = vrot.slane %v154, %v161
    %v163 = vcombine.high %v162, %v162
    %v165 = vunpack.c.l.s4 1966171168
    %v166 = vunpack.c.0.s8 %v165
    %v167 = vlaneseq
    %v168 = vshrl.u32 %v167, 7
    %v169 = vsub.s32 %v166, %v168
    %v170 = vrot.slane %v162, %v169
    %v172 = vunpack.c.l.s4 1966171168
    %v173 = vunpack.c.0.s8 %v172
    %v174 = vlaneseq
    %v175 = vshrl.u32 %v174, 7
    %v176 = vsub.s32 %v173, %v175
    %v177 = vrot.slane %v163, %v176
    %v178 = vlaneseq
    %v179 = vshrl.u32 %v178, 7
    %v180 = vsub.s32 0, %v179
    %v181 = vrot.slane %v170, %v180
    %v182 = vlaneseq
    %v183 = vshrl.u32 %v182, 7
    %v184 = vsub.s32 0, %v183
    %v185 = vrot.slane %v177, %v184
    %v188 = vadd.f32 %v146, %v181
    %v189 = vadd.f32 %v151, %v185
    %v190 = vtanh.pop %v188
    %v191 = vtanh.pop %v189
    %v192 = vld [vmem:[%s3] sm:$0x1]
    %v194 = vlaneseq
    %v195 = vshrl.u32 %v194, 7
    %v196 = vsub.s32 0, %v195
    %v197 = vrot.slane %v192, %v196
    %v199 = vmul.f32 %v190, %v197
    %v200 = vmul.f32 %v191, %v197
    %v201 = vsel %vm72, %v199, 0.0
    %202 = vadd.xlane.f32.xlu0 %v201
    %v203 = vpop.xlane.xlu0 %202
    %v204 = vsel %vm72, %v200, 0.0
    %205 = vadd.xlane.f32.xlu0 %v204
    %v206 = vpop.xlane.xlu0 %205
    %v207 = vld [vmem:[#allocation2] sm:$0x3]
    %v210 = vlaneseq
    %v211 = vand.u32 %v210, 127
    %v212 = vlaneseq
    %v213 = vshrl.u32 %v212, 7
    %v214 = vsub.s32 %v211, %v213
    %v215 = vrot.slane %v203, %v214
    %v216 = vlaneseq
    %v217 = vshrl.u32 %v216, 7
    %v218 = vsub.s32 %v211, %v217
    %v219 = vrot.slane %v206, %v218
    %vm220 = vcmask 1041409
    %v221 = vsel %vm220, %v219, %v215
    %vm223 = vcmask 58368
    %v224 = vsel %vm223, %v221, -inf
    %225 = vmax.xlane.f32.xlu0 %v224
    %v226 = vpop.xlane.xlu0 %225
    %v227 = vmax.f32 %v207, %v226
    %v228 = vsub.f32 %v207, %v227
    %v229 = vmul.f32 %v228, 1.442695
    %v230 = vpow.pop %v229
    %232 = vset.pattern.permute.xlu0 0
    %233 = vperm.xlu0 %232, %v227
    %v234 = vpop.permute.xlu0 %233
    %v235 = vlaneseq
    %v236 = vshrl.u32 %v235, 7
    %v237 = vsub.s32 0, %v236
    %v238 = vrot.slane %v234, %v237
    %v239 = vlaneseq
    %v240 = vshrl.u32 %v239, 7
    %v241 = vsub.s32 1, %v240
    %v242 = vrot.slane %v234, %v241
    %v245 = vsub.f32 %v203, %v238
    %v246 = vsub.f32 %v206, %v242
    %v247 = vmul.f32 %v245, 1.442695
    %v248 = vpow.pop %v247
    %v249 = vmul.f32 %v246, 1.442695
    %v250 = vpow.pop %v249
    %v251 = vld [vmem:[#allocation3] sm:$0x3]
    %v252 = vmul.f32 %v230, %v251
    %255 = vset.pattern.permute.xlu0 0
    %256 = vperm.xlu0 %255, %v248
    %v257 = vpop.permute.xlu0 %256
    %258 = vset.pattern.permute.xlu0 0
    %259 = vperm.xlu0 %258, %v250
    %v260 = vpop.permute.xlu0 %259
    %v261 = vlaneseq
    %v262 = vshrl.u32 %v261, 7
    %v263 = vsub.s32 %v211, %v262
    %v264 = vrot.slane %v257, %v263
    %v265 = vlaneseq
    %v266 = vshrl.u32 %v265, 7
    %v267 = vsub.s32 %v211, %v266
    %v268 = vrot.slane %v260, %v267
    %v269 = vsel %vm220, %v268, %v264
    %v271 = vsel %vm223, %v269, 0.0
    %272 = vadd.xlane.f32.xlu0 %v271
    %v273 = vpop.xlane.xlu0 %272
    %v274 = vadd.f32 %v252, %v273
    %vm275 = vcmask 1024
    %276 = vst.msk [vmem:[#allocation3] sm:$0x3] %vm275, %v274
    %v277 = vld [vmem:[#allocation4] sm:$0x3]
    %279 = vset.pattern.permute.xlu0 0
    %280 = vperm.xlu0 %279, %v230
    %v281 = vpop.permute.xlu0 %280
    %v283 = vmul.f32 %v281, %v277
    %v286 = vmul.f32 %v66, %v257
    %v287 = vmul.f32 %v67, %v260
    %v288 = vsel %vm72, %v286, 0.0
    %v289 = vrot.slane %v288, 4
    %v290 = vadd.f32 %v288, %v289
    %v291 = vrot.slane %v290, 2
    %v292 = vadd.f32 %v290, %v291
    %v293 = vrot.slane %v292, 1
    %v294 = vadd.f32 %v292, %v293
    %v295 = vsel %vm72, %v287, 0.0
    %v296 = vrot.slane %v295, 4
    %v297 = vadd.f32 %v295, %v296
    %v298 = vrot.slane %v297, 2
    %v299 = vadd.f32 %v297, %v298
    %v300 = vrot.slane %v299, 1
    %v301 = vadd.f32 %v299, %v300
    %v304 = vsel %vm220, %v301, %v294
    %v306 = vadd.f32 %v283, %v304
    %vm307 = vcmask 254976
    %308 = vst.msk [vmem:[#allocation4] sm:$0x3] %vm307, %v306
    %309 = vst.msk [vmem:[#allocation2] sm:$0x3] %vm275, %v227
    // Predicated region
    $region34: #{tpu_custom_call.1} parent=1 // pred_check
      %p310 = pneg %p57
    $region35: #{tpu_custom_call.1} parent=1 // pred_check_branch
      %312 = sbr.rel (%p310) target = $region37
    $region36: #{tpu_custom_call.1} parent=1 // pred_region
      %v313 = vld [vmem:[#allocation4] sm:$0x3]
      %v314 = vld [vmem:[#allocation3] sm:$0x3]
      %v315 = vrcp.pop %v314
      %317 = vset.pattern.permute.xlu0 0
      %318 = vperm.xlu0 %317, %v315
      %v319 = vpop.permute.xlu0 %318
      %v321 = vmul.f32 %v313, %v319
      %322 = vst.msk [vmem:[#allocation11] sm:$0x3] %vm307, %v321
    $region37: #{tpu_custom_call.1} parent=1 // pred_fallthru
      _
    // Predicated region
    $region38: #{tpu_custom_call.1} parent=1 // pred_check
      _
    $region39: #{tpu_custom_call.1} parent=1 // pred_check_branch
      %324 = sbr.rel (0) target = $region41
    $region40: #{tpu_custom_call.1} parent=1 // pred_region
      %s326 = ssub.s32 32, 32
      %327 = vsyncadd [#allocation7], %s326
      %s329 = sshll.u32 [#allocation11], 4
      %s330 = int_to_ptr.vmem [resolvable:$true] %s329
      %332 = dma.vmem_to_hbm [thread:$0]  %s330, 32, %s4, [#allocation7]
    $region41: #{tpu_custom_call.1} parent=1 // pred_fallthru
      _
    // Predicated region
    $region42: #{tpu_custom_call.1} parent=1 // pred_check
      _
    $region43: #{tpu_custom_call.1} parent=1 // pred_check_branch
      %334 = sbr.rel (0) target = $region45
    $region44: #{tpu_custom_call.1} parent=1 // pred_region
      %335 = dma.done [#allocation7], 32
    $region45: #{tpu_custom_call.1} parent=1 // pred_fallthru
      _
    %336 = vsyncpa [#allocation6], 1
    %337 = vsyncpa [#allocation9], 1
    %338 = vsyncpa [#allocation7], 1

</llo_original>
